<compile_context>
chip_gen: v7x
topology: tpu7x:2x2x1
jax: 0.10.0
libtpu: 0.0.40
codegen_flags: <defaults>
</compile_context>

<pallas_src>
import functools

import jax
import jax.numpy as jnp
from jax import lax
from jax.experimental import pallas as pl
from jax.experimental.pallas import tpu as pltpu

_SUBLANE = 8
_MAX_TILE_BYTES = 2 * 1024 * 1024   # per-input tile; 2 inputs x 2 bufs = 8 MiB


def _round_up(a, b):
    return ((a + b - 1) // b) * b


def _sq_diff_sum_kernel(x_ref, t_ref, acc_ref, *, rows, nblocks, block_rows,
                        lanes, blocks_per_shard, mask_tail, gate_blocks):
    # grid = (num_shards [parallel], blocks_per_shard [arbitrary / reduction]).
    j = pl.program_id(1)

    @pl.when(j == 0)
    def _init():
        acc_ref[...] = jnp.zeros_like(acc_ref)

    gb = pl.program_id(0) * blocks_per_shard + j   # global row-block index

    def _accumulate():
        x = x_ref[...].astype(jnp.float32)          # cast in VMEM, not in HBM
        t = t_ref[...].astype(jnp.float32)
        d = x - t                                   # VPU sub
        if mask_tail:
            # Ragged last block: rows beyond `rows` hold undefined VMEM data.
            row_ids = gb * block_rows + lax.broadcasted_iota(
                jnp.int32, (block_rows, lanes), 0)
            d = jnp.where(row_ids < rows, d, 0.0)
        sq = d * d                                  # VPU mul
        # Fold onto the resident (8, lanes) accumulator with pure VPU adds
        # (no per-step cross-sublane XLU reduce).
        acc_ref[...] += jnp.sum(
            sq.reshape(block_rows // _SUBLANE, _SUBLANE, lanes), axis=0)

    if gate_blocks:
        # Phantom blocks (grid rounding) are clamped in the index_map; skip
        # their accumulation so nothing is double counted.
        pl.when(gb < nblocks)(_accumulate)
    else:
        _accumulate()


def content_loss_forward(x, target, *, max_tile_bytes=_MAX_TILE_BYTES):
    """Pallas equivalent of ContentLoss.forward: returns (x, mse_loss(x, target))."""
    assert x.shape == target.shape, "x and target must have the same shape"
    n = x.size
    itemsize = jnp.dtype(x.dtype).itemsize

    xf = x.reshape(-1)         # contiguous reshape: bitcast, no HBM copy
    tf = target.reshape(-1)

    # Widest lane count in {512, 256, 128} with n % (8*lanes) == 0, so the
    # flat->2D reshape is a bitcast and rows is a multiple of 8 sublanes.
    lanes = None
    for cand in (512, 256, 128):
        if n % (_SUBLANE * cand) == 0:
            lanes = cand
            break
    if lanes is None:
        # TODO(synk): rare ragged-size fallback — one padded copy (zeros give
        # a zero diff, so the result is unchanged).
        lanes = 128
        padded = _round_up(n, _SUBLANE * lanes)
        xf = jnp.pad(xf, (0, padded - n))
        tf = jnp.pad(tf, (0, padded - n))

    rows = xf.size // lanes
    x2 = xf.reshape(rows, lanes)
    t2 = tf.reshape(rows, lanes)

    # Row tile sized to ~max_tile_bytes per input, multiple of 8 sublanes.
    block_rows = max(_SUBLANE,
                     min(rows,
                         (max_tile_bytes // (lanes * itemsize))
                         // _SUBLANE * _SUBLANE))
    nblocks = pl.cdiv(rows, block_rows)

    # Leading parallel axis: shards the reduction across v7x's 2 TensorCores;
    # a cheap 2-iteration serial outer loop on v5e/v6e.
    num_shards = 2 if nblocks >= 2 else 1
    blocks_per_shard = pl.cdiv(nblocks, num_shards)

    mask_tail = (rows % block_rows) != 0                    # ragged last block
    gate_blocks = (num_shards * blocks_per_shard) != nblocks  # phantom blocks

    def in_index_map(s, j):
        gb = s * blocks_per_shard + j
        if gate_blocks:
            gb = jnp.minimum(gb, nblocks - 1)   # keep phantom block in-bounds
        return (gb, 0)

    in_spec = pl.BlockSpec((block_rows, lanes), in_index_map)
    out_spec = pl.BlockSpec((_SUBLANE, lanes), lambda s, j: (s, 0))

    kernel = functools.partial(
        _sq_diff_sum_kernel, rows=rows, nblocks=nblocks, block_rows=block_rows,
        lanes=lanes, blocks_per_shard=blocks_per_shard,
        mask_tail=mask_tail, gate_blocks=gate_blocks)

    out_rows = num_shards * _SUBLANE
    partials = pl.pallas_call(
        kernel,
        out_shape=jax.ShapeDtypeStruct((out_rows, lanes), jnp.float32),
        grid=(num_shards, blocks_per_shard),
        in_specs=[in_spec, in_spec],
        out_specs=out_spec,
        compiler_params=pltpu.CompilerParams(
            dimension_semantics=("parallel", "arbitrary")),
        cost_estimate=pl.CostEstimate(
            flops=3 * n, transcendentals=0,
            bytes_accessed=2 * n * itemsize + out_rows * lanes * 4),
    )(x2, t2)

    # Final small reduction + single exact scalar divide outside the kernel.
    loss = jnp.sum(partials) / jnp.float32(n)
    # forward(x) returns x unchanged (identity pass-through).
    return x, loss


if __name__ == "__main__":
    # Deterministic small NCHW inputs: batch=2, channels=4, spatial=16x16.
    key = jax.random.PRNGKey(0)
    kx, kt = jax.random.split(key)
    x = jax.random.uniform(kx, (2, 4, 16, 16), dtype=jnp.float32)
    target = jax.random.uniform(kt, (2, 4, 16, 16), dtype=jnp.float32)

    out_x, loss = content_loss_forward(x, target)
    out_x, loss = jax.block_until_ready((out_x, loss))

    # Reference: plain JAX, same semantics as nn.functional.mse_loss (mean).
    ref_loss = jnp.mean((x - target) ** 2)
    assert out_x.shape == x.shape and out_x.dtype == x.dtype
    assert bool(jnp.array_equal(out_x, x)), "forward must return x unchanged"
    assert jnp.allclose(loss, ref_loss, atol=1e-6, rtol=1e-5), (loss, ref_loss)

    print("KERNEL_OK")
</pallas_src>

<mosaic_0001>
module attributes {stable_mosaic.version = 11 : i64} {
  func.func @_sq_diff_sum_kernel(%arg0: i32, %arg1: i32, %arg2: memref<8x256xf32, #tpu.memory_space<vmem>>, %arg3: memref<8x256xf32, #tpu.memory_space<vmem>>, %arg4: memref<8x256xf32, #tpu.memory_space<vmem>>) attributes {dimension_semantics = [#tpu.dimension_semantics<parallel>, #tpu.dimension_semantics<arbitrary>], iteration_bounds = array<i64: 1, 1>, scalar_prefetch = 0 : i64, scratch_operands = 0 : i64, tpu.core_type = #tpu.core_type<tc>, window_params = [{transform_indices = @transform_0, window_bounds = array<i64: 8, 256>}, {transform_indices = @transform_1, window_bounds = array<i64: 8, 256>}, {transform_indices = @transform_2, window_bounds = array<i64: 8, 256>}]} {
    %c0_i32 = arith.constant 0 : i32
    %0 = arith.cmpi eq, %arg1, %c0_i32 : i32
    %1 = arith.extui %0 : i1 to i32
    %c0_i32_0 = arith.constant 0 : i32
    %2 = arith.cmpi ne, %1, %c0_i32_0 : i32
    scf.if %2 {
      %cst_8 = arith.constant 0.000000e+00 : f32
      %12 = vector.broadcast %cst_8 : f32 to vector<8x256xf32>
      %c0_9 = arith.constant 0 : index
      %c0_10 = arith.constant 0 : index
      %13 = vector.load %arg4[%c0_9, %c0_10] : memref<8x256xf32, #tpu.memory_space<vmem>>, vector<8x256xf32>
      tpu.vector_store %arg4[%c0_9, %c0_10], %12 {strides = array<i32>} : memref<8x256xf32, #tpu.memory_space<vmem>>, vector<8x256xf32>,
    } else {
    }
    %c0 = arith.constant 0 : index
    %c0_1 = arith.constant 0 : index
    %3 = vector.load %arg2[%c0, %c0_1] : memref<8x256xf32, #tpu.memory_space<vmem>>, vector<8x256xf32>
    %c0_2 = arith.constant 0 : index
    %c0_3 = arith.constant 0 : index
    %4 = vector.load %arg3[%c0_2, %c0_3] : memref<8x256xf32, #tpu.memory_space<vmem>>, vector<8x256xf32>
    %5 = arith.subf %3, %4 : vector<8x256xf32>
    %6 = arith.mulf %5, %5 : vector<8x256xf32>
    %c0_4 = arith.constant 0 : index
    %c0_5 = arith.constant 0 : index
    %7 = vector.load %arg4[%c0_4, %c0_5] : memref<8x256xf32, #tpu.memory_space<vmem>>, vector<8x256xf32>
    %8 = vector.shape_cast %6 : vector<8x256xf32> to vector<1x8x256xf32>
    %cst = arith.constant dense<0.000000e+00> : vector<8x256xf32>
    %9 = vector.multi_reduction <add>, %8, %cst [0] : vector<1x8x256xf32> to vector<8x256xf32>
    %10 = arith.addf %7, %9 : vector<8x256xf32>
    %c0_6 = arith.constant 0 : index
    %c0_7 = arith.constant 0 : index
    %11 = vector.load %arg4[%c0_6, %c0_7] : memref<8x256xf32, #tpu.memory_space<vmem>>, vector<8x256xf32>
    tpu.vector_store %arg4[%c0_6, %c0_7], %10 {strides = array<i32>} : memref<8x256xf32, #tpu.memory_space<vmem>>, vector<8x256xf32>,
    return
  }
  func.func @transform_0(%arg0: i32, %arg1: i32) -> (i32, i32) {
    %c1_i32 = arith.constant 1 : i32
    %0 = arith.muli %arg0, %c1_i32 : i32
    %1 = arith.addi %0, %arg1 : i32
    %c0_i32 = arith.constant 0 : i32
    %c0_i32_0 = arith.constant 0 : i32
    return %1, %c0_i32 : i32, i32
  }
  func.func @transform_1(%arg0: i32, %arg1: i32) -> (i32, i32) {
    %c1_i32 = arith.constant 1 : i32
    %0 = arith.muli %arg0, %c1_i32 : i32
    %1 = arith.addi %0, %arg1 : i32
    %c0_i32 = arith.constant 0 : i32
    %c0_i32_0 = arith.constant 0 : i32
    return %1, %c0_i32 : i32, i32
  }
  func.func @transform_2(%arg0: i32, %arg1: i32) -> (i32, i32) {
    %c0_i32 = arith.constant 0 : i32
    %c0_i32_0 = arith.constant 0 : i32
    return %arg0, %c0_i32 : i32, i32
  }
}

</mosaic_0001>

<llo_original>
// kernel: tpu_custom_call.1
$region0: #{tpu_custom_call.1}
  #allocation0 [shape = 'u32[]', space=smem, size = 0x4, offset = 0x4, fixed_abs, tag = 'smem constant byte address 0x4 - core index']
  #allocation1 [shape = 'u32[144,128]{1,0:T(1,128)}', space=vmem, size = 0x12000, scoped, tag = 'internal scratch']
  %s0 = inlined_call_operand.hbm [shape: f32[8,256], index: 0, kind: input, shape index: {}]
  %s1 = inlined_call_operand.hbm [shape: f32[8,256], index: 1, kind: input, shape index: {}]
  %s2 = inlined_call_operand.hbm [shape: f32[8,256], index: 2, kind: output, shape index: {}]
  %s3 = sld [smem:[#allocation0]]
  $region30: #{tpu_custom_call.1} parent=0
    _
  %s5 = ssub.s32 1, %s3
  %s6 = scalar_select 0, %s5, %s3
  $region1: #{tpu_custom_call.1} parent=0
    #allocation2 [shape = 'u8[8192]{0}', space=vmem, size = 0x2000, scoped, tag = 'input window, operand 0, single buffered']
    #allocation3 [shape = 's32[1]{0}', space=sflag, size = 0x4, scoped, tag = 'scoped memory for tpu_custom_call.1']
    #allocation4 [shape = 's32[1]{0}', space=sflag, size = 0x4, scoped, tag = 'scoped memory for tpu_custom_call.1']
    #allocation5 [shape = 'u8[8192]{0}', space=vmem, size = 0x2000, scoped, tag = 'input window, operand 1, single buffered']
    #allocation6 [shape = 's32[1]{0}', space=sflag, size = 0x4, scoped, tag = 'scoped memory for tpu_custom_call.1']
    #allocation7 [shape = 'u8[8192]{0}', space=vmem, size = 0x2000, scoped, tag = 'output window, operand 0, single buffered']
    %7 = vsyncpa [#allocation3], 0
    %8 = vsyncpa [#allocation6], 0
    %9 = vsyncpa [#allocation4], 0
    // Predicated region
    $region2: #{tpu_custom_call.1} parent=1 // pred_check
      _
    $region3: #{tpu_custom_call.1} parent=1 // pred_check_branch
      %11 = sbr.rel (0) target = $region5
    $region4: #{tpu_custom_call.1} parent=1 // pred_region
      %s12 = sadd.s32 0, 0
      %s14 = ssub.s32 256, 256
      %15 = vsyncadd [#allocation3], %s14
      %s16 = smul.addr %s12, 2
      %s17 = smul.addr %s16, 128
      %s18 = scalar_lea.hbm %s0, %s17
      %s20 = sshll.u32 [#allocation2], 4
      %s21 = int_to_ptr.vmem [resolvable:$true] %s20
      %23 = dma.hbm_to_vmem [thread:$0]  %s18, 256, %s21, [#allocation3]
    $region5: #{tpu_custom_call.1} parent=1 // pred_fallthru
      _
    // Predicated region
    $region6: #{tpu_custom_call.1} parent=1 // pred_check
      _
    $region7: #{tpu_custom_call.1} parent=1 // pred_check_branch
      %25 = sbr.rel (0) target = $region9
    $region8: #{tpu_custom_call.1} parent=1 // pred_region
      %s26 = sadd.s32 0, 0
      %s28 = ssub.s32 256, 256
      %29 = vsyncadd [#allocation6], %s28
      %s30 = smul.addr %s26, 2
      %s31 = smul.addr %s30, 128
      %s32 = scalar_lea.hbm %s1, %s31
      %s34 = sshll.u32 [#allocation5], 4
      %s35 = int_to_ptr.vmem [resolvable:$true] %s34
      %37 = dma.hbm_to_vmem [thread:$0]  %s32, 256, %s35, [#allocation6]
    $region9: #{tpu_custom_call.1} parent=1 // pred_fallthru
      _
    // Predicated region
    $region10: #{tpu_custom_call.1} parent=1 // pred_check
      _
    $region11: #{tpu_custom_call.1} parent=1 // pred_check_branch
      %39 = sbr.rel (0) target = $region13
    $region12: #{tpu_custom_call.1} parent=1 // pred_region
      %40 = dma.done [#allocation3], 256
    $region13: #{tpu_custom_call.1} parent=1 // pred_fallthru
      _
    // Predicated region
    $region14: #{tpu_custom_call.1} parent=1 // pred_check
      _
    $region15: #{tpu_custom_call.1} parent=1 // pred_check_branch
      %42 = sbr.rel (0) target = $region17
    $region16: #{tpu_custom_call.1} parent=1 // pred_region
      %43 = dma.done [#allocation6], 256
    $region17: #{tpu_custom_call.1} parent=1 // pred_fallthru
      _
    %s44 = sadd.s32 0, 0
    %s45 = sadd.s32 0, 0
    %p46 = scmp.eq.s32.totalorder 0, 0
    // Predicated region
    $region18: #{tpu_custom_call.1} parent=1 // pred_check
      %p47 = pneg %p46
    $region19: #{tpu_custom_call.1} parent=1 // pred_check_branch
      %49 = sbr.rel (%p47) target = $region21
    $region20: #{tpu_custom_call.1} parent=1 // pred_region
      %50 = vst [vmem:[#allocation7] sm:$0xff] 0.0
      %51 = vst [vmem:[#allocation7 + $0x8] sm:$0xff] 0.0
    $region21: #{tpu_custom_call.1} parent=1 // pred_fallthru
      _
    %v52 = vld [vmem:[#allocation2] sm:$0xff]
    %v53 = vld [vmem:[#allocation2 + $0x8] sm:$0xff]
    %v54 = vld [vmem:[#allocation5] sm:$0xff]
    %v55 = vld [vmem:[#allocation5 + $0x8] sm:$0xff]
    %v56 = vsub.f32 %v52, %v54
    %v57 = vsub.f32 %v53, %v55
    %v58 = vmul.f32 %v56, %v56
    %v59 = vmul.f32 %v57, %v57
    %v60 = vld [vmem:[#allocation7] sm:$0xff]
    %v61 = vld [vmem:[#allocation7 + $0x8] sm:$0xff]
    %v62 = vadd.f32 %v58, 0.0
    %v63 = vadd.f32 %v59, 0.0
    %v64 = vadd.f32 %v60, %v62
    %v65 = vadd.f32 %v61, %v63
    %66 = vst [vmem:[#allocation7] sm:$0xff] %v64
    %67 = vst [vmem:[#allocation7 + $0x8] sm:$0xff] %v65
    // Predicated region
    $region22: #{tpu_custom_call.1} parent=1 // pred_check
      _
    $region23: #{tpu_custom_call.1} parent=1 // pred_check_branch
      %69 = sbr.rel (0) target = $region25
    $region24: #{tpu_custom_call.1} parent=1 // pred_region
      %s71 = ssub.s32 256, 256
      %72 = vsyncadd [#allocation4], %s71
      %s74 = sshll.u32 [#allocation7], 4
      %s75 = int_to_ptr.vmem [resolvable:$true] %s74
      %77 = dma.vmem_to_hbm [thread:$0]  %s75, 256, %s2, [#allocation4]
    $region25: #{tpu_custom_call.1} parent=1 // pred_fallthru
      _
    // Predicated region
    $region26: #{tpu_custom_call.1} parent=1 // pred_check
      _
    $region27: #{tpu_custom_call.1} parent=1 // pred_check_branch
      %79 = sbr.rel (0) target = $region29
    $region28: #{tpu_custom_call.1} parent=1 // pred_region
      %80 = dma.done [#allocation4], 256
    $region29: #{tpu_custom_call.1} parent=1 // pred_fallthru
      _
    %81 = vsyncpa [#allocation3], 1
    %82 = vsyncpa [#allocation6], 1
    %83 = vsyncpa [#allocation4], 1

</llo_original>
